<compile_context>
chip_gen: v5e
topology: v5e:2x2
jax: 0.10.0
libtpu: 0.0.40
codegen_flags: <defaults>
</compile_context>

<pallas_src>
import functools

import jax
import jax.numpy as jnp
from jax.experimental import pallas as pl
from jax.experimental.pallas import tpu as pltpu


def mlp_value_kernel(x_ref, w1_ref, b1_ref, w2_ref, b2_ref, w3_ref, b3_ref,
                     o_ref, *, tanh_dtype):
    # Layer 1: tanh(x @ W1 + b1)   -- MXU matmul, EUP tanh.
    h = (jnp.dot(x_ref[...], w1_ref[...], preferred_element_type=jnp.float32)
         + b1_ref[...])
    h = jnp.tanh(h.astype(tanh_dtype)).astype(jnp.float32)
    # Layer 2: tanh(h @ W2 + b2)
    h = (jnp.dot(h, w2_ref[...], preferred_element_type=jnp.float32)
         + b2_ref[...])
    h = jnp.tanh(h.astype(tanh_dtype)).astype(jnp.float32)
    # Output layer Linear(H2 -> 1): VPU multiply + lane reduction.
    # b3 is a scalar living in SMEM.
    v = jnp.sum(h * w3_ref[...], axis=-1, keepdims=True) + b3_ref[0]
    o_ref[...] = v.astype(o_ref.dtype)


def mlp_state_value(x, params, *, batch_tile=512, tanh_dtype=jnp.float32):
    """Fused forward pass of MLPStateValue.

    x: [B, state_dim] float32
    params: dict with w1 (D,H1), b1 (1,H1), w2 (H1,H2), b2 (1,H2),
            w3 (H2,1), b3 (1,1)
    returns: [B, 1] float32
    """
    B, D = x.shape
    H1 = params["w1"].shape[1]
    H2 = params["w2"].shape[1]

    w3_row = params["w3"].reshape(1, H2)  # (H2,1) -> (1,H2) row for VPU reduce
    b3 = params["b3"].reshape(1)          # scalar for SMEM

    # Large, MXU/sublane-friendly batch tiles (multiple of 128) amortize the
    # per-grid-step pipeline overhead.  Clamp so tiny batches are not
    # over-padded; cap at `batch_tile` so big batches keep >=2 grid steps
    # (megacore sharding on v7x).  Weights + a (512, D) tile are tiny vs VMEM.
    batch_tile = min(batch_tile, pl.cdiv(B, 128) * 128)
    batch_tile = pl.cdiv(batch_tile, 128) * 128
    b_pad = pl.cdiv(B, batch_tile) * batch_tile
    if b_pad != B:
        x = jnp.pad(x, ((0, b_pad - B), (0, 0)))

    grid = (b_pad // batch_tile,)
    full = lambda i: (0, 0)

    out = pl.pallas_call(
        functools.partial(mlp_value_kernel, tanh_dtype=tanh_dtype),
        out_shape=jax.ShapeDtypeStruct((b_pad, 1), jnp.float32),
        grid=grid,
        in_specs=[
            pl.BlockSpec((batch_tile, D), lambda i: (i, 0)),    # x tile
            pl.BlockSpec((D, H1), full),                        # W1
            pl.BlockSpec((1, H1), full),                        # b1
            pl.BlockSpec((H1, H2), full),                       # W2
            pl.BlockSpec((1, H2), full),                        # b2
            pl.BlockSpec((1, H2), full),                        # W3 as a row
            pl.BlockSpec(memory_space=pltpu.MemorySpace.SMEM),  # b3 scalar
        ],
        out_specs=pl.BlockSpec((batch_tile, 1), lambda i: (i, 0)),
        compiler_params=pltpu.CompilerParams(
            dimension_semantics=("parallel",)),
    )(x, params["w1"], params["b1"], params["w2"], params["b2"], w3_row, b3)

    return out[:B]


def init_params(key, state_dim, hidden_dims=(64, 64)):
    """Deterministic init mimicking PyTorch nn.Linear default (U[-1/sqrt(fan_in), +])."""
    dims = (state_dim,) + tuple(hidden_dims) + (1,)
    params = {}
    keys = jax.random.split(key, 2 * (len(dims) - 1))
    for li in range(len(dims) - 1):
        fan_in, fan_out = dims[li], dims[li + 1]
        bound = 1.0 / jnp.sqrt(float(fan_in))
        w = jax.random.uniform(keys[2 * li], (fan_in, fan_out),
                               minval=-bound, maxval=bound,
                               dtype=jnp.float32)
        b = jax.random.uniform(keys[2 * li + 1], (1, fan_out),
                               minval=-bound, maxval=bound,
                               dtype=jnp.float32)
        params[f"w{li + 1}"] = w
        params[f"b{li + 1}"] = b
    return params


def reference_forward(x, params):
    h = jnp.tanh(x @ params["w1"] + params["b1"])
    h = jnp.tanh(h @ params["w2"] + params["b2"])
    return h @ params["w3"] + params["b3"]


if __name__ == "__main__":
    key = jax.random.PRNGKey(0)
    k_param, k_x = jax.random.split(key)

    # Non-multiple batch exercises the padding path.
    batch, state_dim, hidden_dims = 200, 8, (64, 64)
    params = init_params(k_param, state_dim, hidden_dims)
    x = jax.random.normal(k_x, (batch, state_dim), dtype=jnp.float32)

    out = jax.block_until_ready(mlp_state_value(x, params))
    ref = reference_forward(x, params)

    assert out.shape == (batch, 1)
    assert jnp.allclose(out, ref, atol=1e-5, rtol=1e-5)

    print("KERNEL_OK")
</pallas_src>

<mosaic_0001>
module attributes {stable_mosaic.version = 11 : i64} {
  func.func @mlp_value_kernel(%arg0: i32, %arg1: memref<256x8xf32, #tpu.memory_space<vmem>>, %arg2: memref<8x64xf32, #tpu.memory_space<vmem>>, %arg3: memref<1x64xf32, #tpu.memory_space<vmem>>, %arg4: memref<64x64xf32, #tpu.memory_space<vmem>>, %arg5: memref<1x64xf32, #tpu.memory_space<vmem>>, %arg6: memref<1x64xf32, #tpu.memory_space<vmem>>, %arg7: memref<1xf32, #tpu.memory_space<smem>>, %arg8: memref<256x1xf32, #tpu.memory_space<vmem>>) attributes {dimension_semantics = [#tpu.dimension_semantics<parallel>], iteration_bounds = array<i64: 1>, scalar_prefetch = 0 : i64, scratch_operands = 0 : i64, tpu.core_type = #tpu.core_type<tc>, window_params = [{transform_indices = @transform_0, window_bounds = array<i64: 256, 8>}, {pipeline_mode = #tpu.pipeline_mode<synchronous>, transform_indices = @transform_1, window_bounds = array<i64: 8, 64>}, {pipeline_mode = #tpu.pipeline_mode<synchronous>, transform_indices = @transform_2, window_bounds = array<i64: 1, 64>}, {pipeline_mode = #tpu.pipeline_mode<synchronous>, transform_indices = @transform_3, window_bounds = array<i64: 64, 64>}, {pipeline_mode = #tpu.pipeline_mode<synchronous>, transform_indices = @transform_4, window_bounds = array<i64: 1, 64>}, {pipeline_mode = #tpu.pipeline_mode<synchronous>, transform_indices = @transform_5, window_bounds = array<i64: 1, 64>}, {transform_indices = @transform_6, window_bounds = array<i64: 1>}, {transform_indices = @transform_7, window_bounds = array<i64: 256, 1>}]} {
    %c0 = arith.constant 0 : index
    %c0_0 = arith.constant 0 : index
    %0 = vector.load %arg1[%c0, %c0_0] : memref<256x8xf32, #tpu.memory_space<vmem>>, vector<256x8xf32>
    %c0_1 = arith.constant 0 : index
    %c0_2 = arith.constant 0 : index
    %1 = vector.load %arg2[%c0_1, %c0_2] : memref<8x64xf32, #tpu.memory_space<vmem>>, vector<8x64xf32>
    %cst = arith.constant dense<0.000000e+00> : vector<256x64xf32>
    %2 = tpu.matmul %0, %1, %cst {dimension_numbers = #tpu.dot_dimension_numbers<[1], [0], [0], [1], [0, 0, 1, 1], [], []>} : vector<256x8xf32>, vector<8x64xf32>, vector<256x64xf32> -> vector<256x64xf32>
    %c0_3 = arith.constant 0 : index
    %c0_4 = arith.constant 0 : index
    %3 = vector.load %arg3[%c0_3, %c0_4] : memref<1x64xf32, #tpu.memory_space<vmem>>, vector<1x64xf32>
    %4 = vector.broadcast %3 : vector<1x64xf32> to vector<256x64xf32>
    %5 = arith.addf %2, %4 : vector<256x64xf32>
    %6 = math.tanh %5 : vector<256x64xf32>
    %c0_5 = arith.constant 0 : index
    %c0_6 = arith.constant 0 : index
    %7 = vector.load %arg4[%c0_5, %c0_6] : memref<64x64xf32, #tpu.memory_space<vmem>>, vector<64x64xf32>
    %cst_7 = arith.constant dense<0.000000e+00> : vector<256x64xf32>
    %8 = tpu.matmul %6, %7, %cst_7 {dimension_numbers = #tpu.dot_dimension_numbers<[1], [0], [0], [1], [0, 0, 1, 1], [], []>} : vector<256x64xf32>, vector<64x64xf32>, vector<256x64xf32> -> vector<256x64xf32>
    %c0_8 = arith.constant 0 : index
    %c0_9 = arith.constant 0 : index
    %9 = vector.load %arg5[%c0_8, %c0_9] : memref<1x64xf32, #tpu.memory_space<vmem>>, vector<1x64xf32>
    %10 = vector.broadcast %9 : vector<1x64xf32> to vector<256x64xf32>
    %11 = arith.addf %8, %10 : vector<256x64xf32>
    %12 = math.tanh %11 : vector<256x64xf32>
    %c0_10 = arith.constant 0 : index
    %c0_11 = arith.constant 0 : index
    %13 = vector.load %arg6[%c0_10, %c0_11] : memref<1x64xf32, #tpu.memory_space<vmem>>, vector<1x64xf32>
    %14 = vector.broadcast %13 : vector<1x64xf32> to vector<256x64xf32>
    %15 = arith.mulf %12, %14 : vector<256x64xf32>
    %cst_12 = arith.constant dense<0.000000e+00> : vector<256xf32>
    %16 = vector.multi_reduction <add>, %15, %cst_12 [1] : vector<256x64xf32> to vector<256xf32>
    %17 = vector.shape_cast %16 : vector<256xf32> to vector<256x1xf32>
    %c0_13 = arith.constant 0 : index
    %18 = memref.load %arg7[%c0_13] : memref<1xf32, #tpu.memory_space<smem>>
    %19 = vector.broadcast %18 : f32 to vector<256x1xf32>
    %20 = arith.addf %17, %19 : vector<256x1xf32>
    %c0_14 = arith.constant 0 : index
    %c0_15 = arith.constant 0 : index
    %21 = vector.load %arg8[%c0_14, %c0_15] : memref<256x1xf32, #tpu.memory_space<vmem>>, vector<256x1xf32>
    tpu.vector_store %arg8[%c0_14, %c0_15], %20 {strides = array<i32>} : memref<256x1xf32, #tpu.memory_space<vmem>>, vector<256x1xf32>,
    return
  }
  func.func @transform_0(%arg0: i32) -> (i32, i32) {
    %c0_i32 = arith.constant 0 : i32
    %c0_i32_0 = arith.constant 0 : i32
    return %arg0, %c0_i32 : i32, i32
  }
  func.func @transform_1(%arg0: i32) -> (i32, i32) {
    %c0_i32 = arith.constant 0 : i32
    %c0_i32_0 = arith.constant 0 : i32
    %c0_i32_1 = arith.constant 0 : i32
    return %c0_i32, %c0_i32_0 : i32, i32
  }
  func.func @transform_2(%arg0: i32) -> (i32, i32) {
    %c0_i32 = arith.constant 0 : i32
    %c0_i32_0 = arith.constant 0 : i32
    %c0_i32_1 = arith.constant 0 : i32
    return %c0_i32, %c0_i32_0 : i32, i32
  }
  func.func @transform_3(%arg0: i32) -> (i32, i32) {
    %c0_i32 = arith.constant 0 : i32
    %c0_i32_0 = arith.constant 0 : i32
    %c0_i32_1 = arith.constant 0 : i32
    return %c0_i32, %c0_i32_0 : i32, i32
  }
  func.func @transform_4(%arg0: i32) -> (i32, i32) {
    %c0_i32 = arith.constant 0 : i32
    %c0_i32_0 = arith.constant 0 : i32
    %c0_i32_1 = arith.constant 0 : i32
    return %c0_i32, %c0_i32_0 : i32, i32
  }
  func.func @transform_5(%arg0: i32) -> (i32, i32) {
    %c0_i32 = arith.constant 0 : i32
    %c0_i32_0 = arith.constant 0 : i32
    %c0_i32_1 = arith.constant 0 : i32
    return %c0_i32, %c0_i32_0 : i32, i32
  }
  func.func @transform_6(%arg0: i32) -> i32 {
    %c0_i32 = arith.constant 0 : i32
    %c0_i32_0 = arith.constant 0 : i32
    return %c0_i32 : i32
  }
  func.func @transform_7(%arg0: i32) -> (i32, i32) {
    %c0_i32 = arith.constant 0 : i32
    %c0_i32_0 = arith.constant 0 : i32
    return %arg0, %c0_i32 : i32, i32
  }
}

</mosaic_0001>

<llo_original>
// kernel: tpu_custom_call.1
$region0: #{tpu_custom_call.1}
  #allocation0 [shape = 'u32[]', space=smem, size = 0x4, offset = 0x4, fixed_abs, tag = 'smem constant byte address 0x4 - core index']
  #allocation1 [shape = 'u32[72,128]{1,0:T(1,128)}', space=vmem, size = 0x9000, scoped, tag = 'internal scratch']
  #allocation2 [shape = 'f32[1]{0:T(128)S(6)}', space=smem, size = 0x200, scoped, tag = 'scoped memory for tpu_custom_call.1']
  %s0 = inlined_call_operand.vmem [shape: f32[256,8], index: 0, kind: input, shape index: {}]
  %s1 = inlined_call_operand.vmem [shape: f32[8,64], index: 1, kind: input, shape index: {}]
  %s2 = inlined_call_operand.vmem [shape: f32[1,64], index: 2, kind: input, shape index: {}]
  %s3 = inlined_call_operand.vmem [shape: f32[64,64], index: 3, kind: input, shape index: {}]
  %s4 = inlined_call_operand.vmem [shape: f32[1,64], index: 4, kind: input, shape index: {}]
  %s5 = inlined_call_operand.vmem [shape: f32[1,64], index: 5, kind: input, shape index: {}]
  %s6 = inlined_call_operand.<no memory space> [shape: f32[1], index: 6, kind: input, shape index: {}]
  %s7 = inlined_call_operand.vmem [shape: f32[256,1], index: 7, kind: output, shape index: {}]
  %s8 = sld [smem:[#allocation0]]
  $region38: #{tpu_custom_call.1} parent=0
    _
  %s10 = ssub.s32 1, %s8
  %s11 = scalar_select 0, %s10, %s8
  %12 = sst [smem:[#allocation2]] %s6
  // Predicated region
  $region2: #{tpu_custom_call.1} parent=0 // pred_check
    _
  $region3: #{tpu_custom_call.1} parent=0 // pred_check_branch
    %14 = sbr.rel (0) target = $region5
  $region4: #{tpu_custom_call.1} parent=0 // pred_region
    _
  $region5: #{tpu_custom_call.1} parent=0 // pred_fallthru
    _
  // Predicated region
  $region6: #{tpu_custom_call.1} parent=0 // pred_check
    _
  $region7: #{tpu_custom_call.1} parent=0 // pred_check_branch
    %16 = sbr.rel (0) target = $region9
  $region8: #{tpu_custom_call.1} parent=0 // pred_region
    _
  $region9: #{tpu_custom_call.1} parent=0 // pred_fallthru
    _
  // Predicated region
  $region10: #{tpu_custom_call.1} parent=0 // pred_check
    _
  $region11: #{tpu_custom_call.1} parent=0 // pred_check_branch
    %18 = sbr.rel (0) target = $region13
  $region12: #{tpu_custom_call.1} parent=0 // pred_region
    _
  $region13: #{tpu_custom_call.1} parent=0 // pred_fallthru
    _
  // Predicated region
  $region14: #{tpu_custom_call.1} parent=0 // pred_check
    _
  $region15: #{tpu_custom_call.1} parent=0 // pred_check_branch
    %20 = sbr.rel (0) target = $region17
  $region16: #{tpu_custom_call.1} parent=0 // pred_region
    _
  $region17: #{tpu_custom_call.1} parent=0 // pred_fallthru
    _
  // Predicated region
  $region18: #{tpu_custom_call.1} parent=0 // pred_check
    _
  $region19: #{tpu_custom_call.1} parent=0 // pred_check_branch
    %22 = sbr.rel (0) target = $region21
  $region20: #{tpu_custom_call.1} parent=0 // pred_region
    _
  $region21: #{tpu_custom_call.1} parent=0 // pred_fallthru
    _
  // Predicated region
  $region22: #{tpu_custom_call.1} parent=0 // pred_check
    _
  $region23: #{tpu_custom_call.1} parent=0 // pred_check_branch
    %24 = sbr.rel (0) target = $region25
  $region24: #{tpu_custom_call.1} parent=0 // pred_region
    _
  $region25: #{tpu_custom_call.1} parent=0 // pred_fallthru
    _
  // Predicated region
  $region26: #{tpu_custom_call.1} parent=0 // pred_check
    _
  $region27: #{tpu_custom_call.1} parent=0 // pred_check_branch
    %26 = sbr.rel (0) target = $region29
  $region28: #{tpu_custom_call.1} parent=0 // pred_region
    _
  $region29: #{tpu_custom_call.1} parent=0 // pred_fallthru
    _
  %v27 = vld [vmem:[%s0] sm:$0xff]
  %v28 = vld [vmem:[%s0 + $0x8] sm:$0xff]
  %v29 = vld [vmem:[%s0 + $0x10] sm:$0xff]
  %v30 = vld [vmem:[%s0 + $0x18] sm:$0xff]
  %v31 = vld [vmem:[%s0 + $0x20] sm:$0xff]
  %v32 = vld [vmem:[%s0 + $0x28] sm:$0xff]
  %v33 = vld [vmem:[%s0 + $0x30] sm:$0xff]
  %v34 = vld [vmem:[%s0 + $0x38] sm:$0xff]
  %v35 = vld [vmem:[%s0 + $0x40] sm:$0xff]
  %v36 = vld [vmem:[%s0 + $0x48] sm:$0xff]
  %v37 = vld [vmem:[%s0 + $0x50] sm:$0xff]
  %v38 = vld [vmem:[%s0 + $0x58] sm:$0xff]
  %v39 = vld [vmem:[%s0 + $0x60] sm:$0xff]
  %v40 = vld [vmem:[%s0 + $0x68] sm:$0xff]
  %v41 = vld [vmem:[%s0 + $0x70] sm:$0xff]
  %v42 = vld [vmem:[%s0 + $0x78] sm:$0xff]
  %v43 = vld [vmem:[%s0 + $0x80] sm:$0xff]
  %v44 = vld [vmem:[%s0 + $0x88] sm:$0xff]
  %v45 = vld [vmem:[%s0 + $0x90] sm:$0xff]
  %v46 = vld [vmem:[%s0 + $0x98] sm:$0xff]
  %v47 = vld [vmem:[%s0 + $0xa0] sm:$0xff]
  %v48 = vld [vmem:[%s0 + $0xa8] sm:$0xff]
  %v49 = vld [vmem:[%s0 + $0xb0] sm:$0xff]
  %v50 = vld [vmem:[%s0 + $0xb8] sm:$0xff]
  %v51 = vld [vmem:[%s0 + $0xc0] sm:$0xff]
  %v52 = vld [vmem:[%s0 + $0xc8] sm:$0xff]
  %v53 = vld [vmem:[%s0 + $0xd0] sm:$0xff]
  %v54 = vld [vmem:[%s0 + $0xd8] sm:$0xff]
  %v55 = vld [vmem:[%s0 + $0xe0] sm:$0xff]
  %v56 = vld [vmem:[%s0 + $0xe8] sm:$0xff]
  %v57 = vld [vmem:[%s0 + $0xf0] sm:$0xff]
  %v58 = vld [vmem:[%s0 + $0xf8] sm:$0xff]
  %v59 = vld [vmem:[%s1] sm:$0xff]
  %v60 = vld [vmem:[%s2] sm:$0x1]
  %v62 = vperm.slane %v60, 0
  %vm64 = vcmask 64512
  %v66 = vsel %vm64, %v27, 0
  %v69 = vsel %vm64, %v28, 0
  %v72 = vsel %vm64, %v29, 0
  %v75 = vsel %vm64, %v30, 0
  %v78 = vsel %vm64, %v31, 0
  %v81 = vsel %vm64, %v32, 0
  %v84 = vsel %vm64, %v33, 0
  %v87 = vsel %vm64, %v34, 0
  %v90 = vsel %vm64, %v35, 0
  %v93 = vsel %vm64, %v36, 0
  %v96 = vsel %vm64, %v37, 0
  %v99 = vsel %vm64, %v38, 0
  %v102 = vsel %vm64, %v39, 0
  %v105 = vsel %vm64, %v40, 0
  %v108 = vsel %vm64, %v41, 0
  %v111 = vsel %vm64, %v42, 0
  %v114 = vsel %vm64, %v43, 0
  %v117 = vsel %vm64, %v44, 0
  %v120 = vsel %vm64, %v45, 0
  %v123 = vsel %vm64, %v46, 0
  %v126 = vsel %vm64, %v47, 0
  %v129 = vsel %vm64, %v48, 0
  %v132 = vsel %vm64, %v49, 0
  %v135 = vsel %vm64, %v50, 0
  %v138 = vsel %vm64, %v51, 0
  %v141 = vsel %vm64, %v52, 0
  %v144 = vsel %vm64, %v53, 0
  %v147 = vsel %vm64, %v54, 0
  %v150 = vsel %vm64, %v55, 0
  %v153 = vsel %vm64, %v56, 0
  %v156 = vsel %vm64, %v57, 0
  %v159 = vsel %vm64, %v58, 0
  %161 = vmatpush.msra.mxu0 0.0
  %162 = vmatpush.msra.mxu0 0.0
  %163 = vmatpush.msra.mxu0 0.0
  %164 = vmatpush.msra.mxu0 0.0
  %165 = vmatpush.msra.mxu0 0.0
  %166 = vmatpush.msra.mxu0 0.0
  %167 = vmatpush.msra.mxu0 0.0
  %168 = vmatpush.msra.mxu0 0.0
  %169 = vmatpush.msra.mxu0 0.0
  %170 = vmatpush.msra.mxu0 0.0
  %171 = vmatpush.msra.mxu0 0.0
  %172 = vmatpush.msra.mxu0 0.0
  %173 = vmatpush.msra.mxu0 0.0
  %174 = vmatpush.msra.mxu0 0.0
  %175 = vmatpush.msra.mxu0 0.0
  %176 = vmatpush.msra.mxu0 %v59
  %177 = vmatmul.f32.gmra.mxu0 %v66
  %v178 = vpop.f32.mrf.mxu0
  %v179 = vadd.f32 %v62, %v178
  %180 = vmatmul.f32.gmra.mxu0 %v69
  %v181 = vpop.f32.mrf.mxu0
  %v182 = vadd.f32 %v62, %v181
  %183 = vmatmul.f32.gmra.mxu0 %v72
  %v184 = vpop.f32.mrf.mxu0
  %v185 = vadd.f32 %v62, %v184
  %186 = vmatmul.f32.gmra.mxu0 %v75
  %v187 = vpop.f32.mrf.mxu0
  %v188 = vadd.f32 %v62, %v187
  %189 = vmatmul.f32.gmra.mxu0 %v78
  %v190 = vpop.f32.mrf.mxu0
  %v191 = vadd.f32 %v62, %v190
  %192 = vmatmul.f32.gmra.mxu0 %v81
  %v193 = vpop.f32.mrf.mxu0
  %v194 = vadd.f32 %v62, %v193
  %195 = vmatmul.f32.gmra.mxu0 %v84
  %v196 = vpop.f32.mrf.mxu0
  %v197 = vadd.f32 %v62, %v196
  %198 = vmatmul.f32.gmra.mxu0 %v87
  %v199 = vpop.f32.mrf.mxu0
  %v200 = vadd.f32 %v62, %v199
  %201 = vmatmul.f32.gmra.mxu0 %v90
  %v202 = vpop.f32.mrf.mxu0
  %v203 = vadd.f32 %v62, %v202
  %204 = vmatmul.f32.gmra.mxu0 %v93
  %v205 = vpop.f32.mrf.mxu0
  %v206 = vadd.f32 %v62, %v205
  %207 = vmatmul.f32.gmra.mxu0 %v96
  %v208 = vpop.f32.mrf.mxu0
  %v209 = vadd.f32 %v62, %v208
  %210 = vmatmul.f32.gmra.mxu0 %v99
  %v211 = vpop.f32.mrf.mxu0
  %v212 = vadd.f32 %v62, %v211
  %213 = vmatmul.f32.gmra.mxu0 %v102
  %v214 = vpop.f32.mrf.mxu0
  %v215 = vadd.f32 %v62, %v214
  %216 = vmatmul.f32.gmra.mxu0 %v105
  %v217 = vpop.f32.mrf.mxu0
  %v218 = vadd.f32 %v62, %v217
  %219 = vmatmul.f32.gmra.mxu0 %v108
  %v220 = vpop.f32.mrf.mxu0
  %v221 = vadd.f32 %v62, %v220
  %222 = vmatmul.f32.gmra.mxu0 %v111
  %v223 = vpop.f32.mrf.mxu0
  %v224 = vadd.f32 %v62, %v223
  %225 = vmatmul.f32.gmra.mxu0 %v114
  %v226 = vpop.f32.mrf.mxu0
  %v227 = vadd.f32 %v62, %v226
  %228 = vmatmul.f32.gmra.mxu0 %v117
  %v229 = vpop.f32.mrf.mxu0
  %v230 = vadd.f32 %v62, %v229
  %231 = vmatmul.f32.gmra.mxu0 %v120
  %v232 = vpop.f32.mrf.mxu0
  %v233 = vadd.f32 %v62, %v232
  %234 = vmatmul.f32.gmra.mxu0 %v123
  %v235 = vpop.f32.mrf.mxu0
  %v236 = vadd.f32 %v62, %v235
  %237 = vmatmul.f32.gmra.mxu0 %v126
  %v238 = vpop.f32.mrf.mxu0
  %v239 = vadd.f32 %v62, %v238
  %240 = vmatmul.f32.gmra.mxu0 %v129
  %v241 = vpop.f32.mrf.mxu0
  %v242 = vadd.f32 %v62, %v241
  %243 = vmatmul.f32.gmra.mxu0 %v132
  %v244 = vpop.f32.mrf.mxu0
  %v245 = vadd.f32 %v62, %v244
  %246 = vmatmul.f32.gmra.mxu0 %v135
  %v247 = vpop.f32.mrf.mxu0
  %v248 = vadd.f32 %v62, %v247
  %249 = vmatmul.f32.gmra.mxu0 %v138
  %v250 = vpop.f32.mrf.mxu0
  %v251 = vadd.f32 %v62, %v250
  %252 = vmatmul.f32.gmra.mxu0 %v141
  %v253 = vpop.f32.mrf.mxu0
  %v254 = vadd.f32 %v62, %v253
  %255 = vmatmul.f32.gmra.mxu0 %v144
  %v256 = vpop.f32.mrf.mxu0
  %v257 = vadd.f32 %v62, %v256
  %258 = vmatmul.f32.gmra.mxu0 %v147
  %v259 = vpop.f32.mrf.mxu0
  %v260 = vadd.f32 %v62, %v259
  %261 = vmatmul.f32.gmra.mxu0 %v150
  %v262 = vpop.f32.mrf.mxu0
  %v263 = vadd.f32 %v62, %v262
  %264 = vmatmul.f32.gmra.mxu0 %v153
  %v265 = vpop.f32.mrf.mxu0
  %v266 = vadd.f32 %v62, %v265
  %267 = vmatmul.f32.gmra.mxu0 %v156
  %v268 = vpop.f32.mrf.mxu0
  %v269 = vadd.f32 %v62, %v268
  %270 = vmatmul.f32.gmra.mxu0 %v159
  %v271 = vpop.f32.mrf.mxu0
  %v272 = vadd.f32 %v62, %v271
  %273 = vdwg.mxu0
  %v274 = vtanh.pop %v179
  %v275 = vtanh.pop %v182
  %v276 = vtanh.pop %v185
  %v277 = vtanh.pop %v188
  %v278 = vtanh.pop %v191
  %v279 = vtanh.pop %v194
  %v280 = vtanh.pop %v197
  %v281 = vtanh.pop %v200
  %v282 = vtanh.pop %v203
  %v283 = vtanh.pop %v206
  %v284 = vtanh.pop %v209
  %v285 = vtanh.pop %v212
  %v286 = vtanh.pop %v215
  %v287 = vtanh.pop %v218
  %v288 = vtanh.pop %v221
  %v289 = vtanh.pop %v224
  %v290 = vtanh.pop %v227
  %v291 = vtanh.pop %v230
  %v292 = vtanh.pop %v233
  %v293 = vtanh.pop %v236
  %v294 = vtanh.pop %v239
  %v295 = vtanh.pop %v242
  %v296 = vtanh.pop %v245
  %v297 = vtanh.pop %v248
  %v298 = vtanh.pop %v251
  %v299 = vtanh.pop %v254
  %v300 = vtanh.pop %v257
  %v301 = vtanh.pop %v260
  %v302 = vtanh.pop %v263
  %v303 = vtanh.pop %v266
  %v304 = vtanh.pop %v269
  %v305 = vtanh.pop %v272
  %v306 = vld [vmem:[%s3] sm:$0xff]
  %v307 = vld [vmem:[%s3 + $0x8] sm:$0xff]
  %v308 = vld [vmem:[%s3 + $0x10] sm:$0xff]
  %v309 = vld [vmem:[%s3 + $0x18] sm:$0xff]
  %v310 = vld [vmem:[%s3 + $0x20] sm:$0xff]
  %v311 = vld [vmem:[%s3 + $0x28] sm:$0xff]
  %v312 = vld [vmem:[%s3 + $0x30] sm:$0xff]
  %v313 = vld [vmem:[%s3 + $0x38] sm:$0xff]
  %v314 = vld [vmem:[%s4] sm:$0x1]
  %v316 = vperm.slane %v314, 0
  %vm318 = vcmask 523264
  %v320 = vsel %vm318, %v274, 0
  %v323 = vsel %vm318, %v275, 0
  %v326 = vsel %vm318, %v276, 0
  %v329 = vsel %vm318, %v277, 0
  %v332 = vsel %vm318, %v278, 0
  %v335 = vsel %vm318, %v279, 0
  %v338 = vsel %vm318, %v280, 0
  %v341 = vsel %vm318, %v281, 0
  %v344 = vsel %vm318, %v282, 0
  %v347 = vsel %vm318, %v283, 0
  %v350 = vsel %vm318, %v284, 0
  %v353 = vsel %vm318, %v285, 0
  %v356 = vsel %vm318, %v286, 0
  %v359 = vsel %vm318, %v287, 0
  %v362 = vsel %vm318, %v288, 0
  %v365 = vsel %vm318, %v289, 0
  %v368 = vsel %vm318, %v290, 0
  %v371 = vsel %vm318, %v291, 0
  %v374 = vsel %vm318, %v292, 0
  %v377 = vsel %vm318, %v293, 0
  %v380 = vsel %vm318, %v294, 0
  %v383 = vsel %vm318, %v295, 0
  %v386 = vsel %vm318, %v296, 0
  %v389 = vsel %vm318, %v297, 0
  %v392 = vsel %vm318, %v298, 0
  %v395 = vsel %vm318, %v299, 0
  %v398 = vsel %vm318, %v300, 0
  %v401 = vsel %vm318, %v301, 0
  %v404 = vsel %vm318, %v302, 0
  %v407 = vsel %vm318, %v303, 0
  %v410 = vsel %vm318, %v304, 0
  %v413 = vsel %vm318, %v305, 0
  %415 = vmatpush.msra.mxu0 0.0
  %416 = vmatpush.msra.mxu0 0.0
  %417 = vmatpush.msra.mxu0 0.0
  %418 = vmatpush.msra.mxu0 0.0
  %419 = vmatpush.msra.mxu0 0.0
  %420 = vmatpush.msra.mxu0 0.0
  %421 = vmatpush.msra.mxu0 0.0
  %422 = vmatpush.msra.mxu0 0.0
  %423 = vmatpush.msra.mxu0 %v313
  %424 = vmatpush.msra.mxu0 %v312
  %425 = vmatpush.msra.mxu0 %v311
  %426 = vmatpush.msra.mxu0 %v310
  %427 = vmatpush.msra.mxu0 %v309
  %428 = vmatpush.msra.mxu0 %v308
  %429 = vmatpush.msra.mxu0 %v307
  %430 = vmatpush.msra.mxu0 %v306
  %431 = vmatmul.f32.gmra.mxu0 %v320
  %v432 = vpop.f32.mrf.mxu0
  %v433 = vadd.f32 %v316, %v432
  %434 = vmatmul.f32.gmra.mxu0 %v323
  %v435 = vpop.f32.mrf.mxu0
  %v436 = vadd.f32 %v316, %v435
  %437 = vmatmul.f32.gmra.mxu0 %v326
  %v438 = vpop.f32.mrf.mxu0
  %v439 = vadd.f32 %v316, %v438
  %440 = vmatmul.f32.gmra.mxu0 %v329
  %v441 = vpop.f32.mrf.mxu0
  %v442 = vadd.f32 %v316, %v441
  %443 = vmatmul.f32.gmra.mxu0 %v332
  %v444 = vpop.f32.mrf.mxu0
  %v445 = vadd.f32 %v316, %v444
  %446 = vmatmul.f32.gmra.mxu0 %v335
  %v447 = vpop.f32.mrf.mxu0
  %v448 = vadd.f32 %v316, %v447
  %449 = vmatmul.f32.gmra.mxu0 %v338
  %v450 = vpop.f32.mrf.mxu0
  %v451 = vadd.f32 %v316, %v450
  %452 = vmatmul.f32.gmra.mxu0 %v341
  %v453 = vpop.f32.mrf.mxu0
  %v454 = vadd.f32 %v316, %v453
  %455 = vmatmul.f32.gmra.mxu0 %v344
  %v456 = vpop.f32.mrf.mxu0
  %v457 = vadd.f32 %v316, %v456
  %458 = vmatmul.f32.gmra.mxu0 %v347
  %v459 = vpop.f32.mrf.mxu0
  %v460 = vadd.f32 %v316, %v459
  %461 = vmatmul.f32.gmra.mxu0 %v350
  %v462 = vpop.f32.mrf.mxu0
  %v463 = vadd.f32 %v316, %v462
  %464 = vmatmul.f32.gmra.mxu0 %v353
  %v465 = vpop.f32.mrf.mxu0
  %v466 = vadd.f32 %v316, %v465
  %467 = vmatmul.f32.gmra.mxu0 %v356
  %v468 = vpop.f32.mrf.mxu0
  %v469 = vadd.f32 %v316, %v468
  %470 = vmatmul.f32.gmra.mxu0 %v359
  %v471 = vpop.f32.mrf.mxu0
  %v472 = vadd.f32 %v316, %v471
  %473 = vmatmul.f32.gmra.mxu0 %v362
  %v474 = vpop.f32.mrf.mxu0
  %v475 = vadd.f32 %v316, %v474
  %476 = vmatmul.f32.gmra.mxu0 %v365
  %v477 = vpop.f32.mrf.mxu0
  %v478 = vadd.f32 %v316, %v477
  %479 = vmatmul.f32.gmra.mxu0 %v368
  %v480 = vpop.f32.mrf.mxu0
  %v481 = vadd.f32 %v316, %v480
  %482 = vmatmul.f32.gmra.mxu0 %v371
  %v483 = vpop.f32.mrf.mxu0
  %v484 = vadd.f32 %v316, %v483
  %485 = vmatmul.f32.gmra.mxu0 %v374
  %v486 = vpop.f32.mrf.mxu0
  %v487 = vadd.f32 %v316, %v486
  %488 = vmatmul.f32.gmra.mxu0 %v377
  %v489 = vpop.f32.mrf.mxu0
  %v490 = vadd.f32 %v316, %v489
  %491 = vmatmul.f32.gmra.mxu0 %v380
  %v492 = vpop.f32.mrf.mxu0
  %v493 = vadd.f32 %v316, %v492
  %494 = vmatmul.f32.gmra.mxu0 %v383
  %v495 = vpop.f32.mrf.mxu0
  %v496 = vadd.f32 %v316, %v495
  %497 = vmatmul.f32.gmra.mxu0 %v386
  %v498 = vpop.f32.mrf.mxu0
  %v499 = vadd.f32 %v316, %v498
  %500 = vmatmul.f32.gmra.mxu0 %v389
  %v501 = vpop.f32.mrf.mxu0
  %v502 = vadd.f32 %v316, %v501
  %503 = vmatmul.f32.gmra.mxu0 %v392
  %v504 = vpop.f32.mrf.mxu0
  %v505 = vadd.f32 %v316, %v504
  %506 = vmatmul.f32.gmra.mxu0 %v395
  %v507 = vpop.f32.mrf.mxu0
  %v508 = vadd.f32 %v316, %v507
  %509 = vmatmul.f32.gmra.mxu0 %v398
  %v510 = vpop.f32.mrf.mxu0
  %v511 = vadd.f32 %v316, %v510
  %512 = vmatmul.f32.gmra.mxu0 %v401
  %v513 = vpop.f32.mrf.mxu0
  %v514 = vadd.f32 %v316, %v513
  %515 = vmatmul.f32.gmra.mxu0 %v404
  %v516 = vpop.f32.mrf.mxu0
  %v517 = vadd.f32 %v316, %v516
  %518 = vmatmul.f32.gmra.mxu0 %v407
  %v519 = vpop.f32.mrf.mxu0
  %v520 = vadd.f32 %v316, %v519
  %521 = vmatmul.f32.gmra.mxu0 %v410
  %v522 = vpop.f32.mrf.mxu0
  %v523 = vadd.f32 %v316, %v522
  %524 = vmatmul.f32.gmra.mxu0 %v413
  %v525 = vpop.f32.mrf.mxu0
  %v526 = vadd.f32 %v316, %v525
  %527 = vdwg.mxu0
  %v528 = vtanh.pop %v433
  %v529 = vtanh.pop %v436
  %v530 = vtanh.pop %v439
  %v531 = vtanh.pop %v442
  %v532 = vtanh.pop %v445
  %v533 = vtanh.pop %v448
  %v534 = vtanh.pop %v451
  %v535 = vtanh.pop %v454
  %v536 = vtanh.pop %v457
  %v537 = vtanh.pop %v460
  %v538 = vtanh.pop %v463
  %v539 = vtanh.pop %v466
  %v540 = vtanh.pop %v469
  %v541 = vtanh.pop %v472
  %v542 = vtanh.pop %v475
  %v543 = vtanh.pop %v478
  %v544 = vtanh.pop %v481
  %v545 = vtanh.pop %v484
  %v546 = vtanh.pop %v487
  %v547 = vtanh.pop %v490
  %v548 = vtanh.pop %v493
  %v549 = vtanh.pop %v496
  %v550 = vtanh.pop %v499
  %v551 = vtanh.pop %v502
  %v552 = vtanh.pop %v505
  %v553 = vtanh.pop %v508
  %v554 = vtanh.pop %v511
  %v555 = vtanh.pop %v514
  %v556 = vtanh.pop %v517
  %v557 = vtanh.pop %v520
  %v558 = vtanh.pop %v523
  %v559 = vtanh.pop %v526
  %v560 = vld [vmem:[%s5] sm:$0x1]
  %v562 = vperm.slane %v560, 0
  %v564 = vmul.f32 %v528, %v562
  %v565 = vmul.f32 %v529, %v562
  %v566 = vmul.f32 %v530, %v562
  %v567 = vmul.f32 %v531, %v562
  %v568 = vmul.f32 %v532, %v562
  %v569 = vmul.f32 %v533, %v562
  %v570 = vmul.f32 %v534, %v562
  %v571 = vmul.f32 %v535, %v562
  %v572 = vmul.f32 %v536, %v562
  %v573 = vmul.f32 %v537, %v562
  %v574 = vmul.f32 %v538, %v562
  %v575 = vmul.f32 %v539, %v562
  %v576 = vmul.f32 %v540, %v562
  %v577 = vmul.f32 %v541, %v562
  %v578 = vmul.f32 %v542, %v562
  %v579 = vmul.f32 %v543, %v562
  %v580 = vmul.f32 %v544, %v562
  %v581 = vmul.f32 %v545, %v562
  %v582 = vmul.f32 %v546, %v562
  %v583 = vmul.f32 %v547, %v562
  %v584 = vmul.f32 %v548, %v562
  %v585 = vmul.f32 %v549, %v562
  %v586 = vmul.f32 %v550, %v562
  %v587 = vmul.f32 %v551, %v562
  %v588 = vmul.f32 %v552, %v562
  %v589 = vmul.f32 %v553, %v562
  %v590 = vmul.f32 %v554, %v562
  %v591 = vmul.f32 %v555, %v562
  %v592 = vmul.f32 %v556, %v562
  %v593 = vmul.f32 %v557, %v562
  %v594 = vmul.f32 %v558, %v562
  %v595 = vmul.f32 %v559, %v562
  %v596 = vsel %vm318, %v564, 0.0
  %597 = vadd.xlane.f32.xlu0 %v596
  %v598 = vpop.xlane.xlu0 %597
  %v599 = vsel %vm318, %v565, 0.0
  %600 = vadd.xlane.f32.xlu0 %v599
  %v601 = vpop.xlane.xlu0 %600
  %v602 = vsel %vm318, %v566, 0.0
  %603 = vadd.xlane.f32.xlu0 %v602
  %v604 = vpop.xlane.xlu0 %603
  %v605 = vsel %vm318, %v567, 0.0
  %606 = vadd.xlane.f32.xlu0 %v605
  %v607 = vpop.xlane.xlu0 %606
  %v608 = vsel %vm318, %v568, 0.0
  %609 = vadd.xlane.f32.xlu0 %v608
  %v610 = vpop.xlane.xlu0 %609
  %v611 = vsel %vm318, %v569, 0.0
  %612 = vadd.xlane.f32.xlu0 %v611
  %v613 = vpop.xlane.xlu0 %612
  %v614 = vsel %vm318, %v570, 0.0
  %615 = vadd.xlane.f32.xlu0 %v614
  %v616 = vpop.xlane.xlu0 %615
  %v617 = vsel %vm318, %v571, 0.0
  %618 = vadd.xlane.f32.xlu0 %v617
  %v619 = vpop.xlane.xlu0 %618
  %v620 = vsel %vm318, %v572, 0.0
  %621 = vadd.xlane.f32.xlu0 %v620
  %v622 = vpop.xlane.xlu0 %621
  %v623 = vsel %vm318, %v573, 0.0
  %624 = vadd.xlane.f32.xlu0 %v623
  %v625 = vpop.xlane.xlu0 %624
  %v626 = vsel %vm318, %v574, 0.0
  %627 = vadd.xlane.f32.xlu0 %v626
  %v628 = vpop.xlane.xlu0 %627
  %v629 = vsel %vm318, %v575, 0.0
  %630 = vadd.xlane.f32.xlu0 %v629
  %v631 = vpop.xlane.xlu0 %630
  %v632 = vsel %vm318, %v576, 0.0
  %633 = vadd.xlane.f32.xlu0 %v632
  %v634 = vpop.xlane.xlu0 %633
  %v635 = vsel %vm318, %v577, 0.0
  %636 = vadd.xlane.f32.xlu0 %v635
  %v637 = vpop.xlane.xlu0 %636
  %v638 = vsel %vm318, %v578, 0.0
  %639 = vadd.xlane.f32.xlu0 %v638
  %v640 = vpop.xlane.xlu0 %639
  %v641 = vsel %vm318, %v579, 0.0
  %642 = vadd.xlane.f32.xlu0 %v641
  %v643 = vpop.xlane.xlu0 %642
  %v644 = vsel %vm318, %v580, 0.0
  %645 = vadd.xlane.f32.xlu0 %v644
  %v646 = vpop.xlane.xlu0 %645
  %v647 = vsel %vm318, %v581, 0.0
  %648 = vadd.xlane.f32.xlu0 %v647
  %v649 = vpop.xlane.xlu0 %648
  %v650 = vsel %vm318, %v582, 0.0
  %651 = vadd.xlane.f32.xlu0 %v650
  %v652 = vpop.xlane.xlu0 %651
  %v653 = vsel %vm318, %v583, 0.0
  %654 = vadd.xlane.f32.xlu0 %v653
  %v655 = vpop.xlane.xlu0 %654
  %v656 = vsel %vm318, %v584, 0.0
  %657 = vadd.xlane.f32.xlu0 %v656
  %v658 = vpop.xlane.xlu0 %657
  %v659 = vsel %vm318, %v585, 0.0
  %660 = vadd.xlane.f32.xlu0 %v659
  %v661 = vpop.xlane.xlu0 %660
  %v662 = vsel %vm318, %v586, 0.0
  %663 = vadd.xlane.f32.xlu0 %v662
  %v664 = vpop.xlane.xlu0 %663
  %v665 = vsel %vm318, %v587, 0.0
  %666 = vadd.xlane.f32.xlu0 %v665
  %v667 = vpop.xlane.xlu0 %666
  %v668 = vsel %vm318, %v588, 0.0
  %669 = vadd.xlane.f32.xlu0 %v668
  %v670 = vpop.xlane.xlu0 %669
  %v671 = vsel %vm318, %v589, 0.0
  %672 = vadd.xlane.f32.xlu0 %v671
  %v673 = vpop.xlane.xlu0 %672
  %v674 = vsel %vm318, %v590, 0.0
  %675 = vadd.xlane.f32.xlu0 %v674
  %v676 = vpop.xlane.xlu0 %675
  %v677 = vsel %vm318, %v591, 0.0
  %678 = vadd.xlane.f32.xlu0 %v677
  %v679 = vpop.xlane.xlu0 %678
  %v680 = vsel %vm318, %v592, 0.0
  %681 = vadd.xlane.f32.xlu0 %v680
  %v682 = vpop.xlane.xlu0 %681
  %v683 = vsel %vm318, %v593, 0.0
  %684 = vadd.xlane.f32.xlu0 %v683
  %v685 = vpop.xlane.xlu0 %684
  %v686 = vsel %vm318, %v594, 0.0
  %687 = vadd.xlane.f32.xlu0 %v686
  %v688 = vpop.xlane.xlu0 %687
  %v689 = vsel %vm318, %v595, 0.0
  %690 = vadd.xlane.f32.xlu0 %v689
  %v691 = vpop.xlane.xlu0 %690
  %s692 = sld [smem:[#allocation2]]
  %v693 = vstv %s692
  %v694 = vadd.f32 %v598, %v693
  %v695 = vadd.f32 %v601, %v693
  %v696 = vadd.f32 %v604, %v693
  %v697 = vadd.f32 %v607, %v693
  %v698 = vadd.f32 %v610, %v693
  %v699 = vadd.f32 %v613, %v693
  %v700 = vadd.f32 %v616, %v693
  %v701 = vadd.f32 %v619, %v693
  %v702 = vadd.f32 %v622, %v693
  %v703 = vadd.f32 %v625, %v693
  %v704 = vadd.f32 %v628, %v693
  %v705 = vadd.f32 %v631, %v693
  %v706 = vadd.f32 %v634, %v693
  %v707 = vadd.f32 %v637, %v693
  %v708 = vadd.f32 %v640, %v693
  %v709 = vadd.f32 %v643, %v693
  %v710 = vadd.f32 %v646, %v693
  %v711 = vadd.f32 %v649, %v693
  %v712 = vadd.f32 %v652, %v693
  %v713 = vadd.f32 %v655, %v693
  %v714 = vadd.f32 %v658, %v693
  %v715 = vadd.f32 %v661, %v693
  %v716 = vadd.f32 %v664, %v693
  %v717 = vadd.f32 %v667, %v693
  %v718 = vadd.f32 %v670, %v693
  %v719 = vadd.f32 %v673, %v693
  %v720 = vadd.f32 %v676, %v693
  %v721 = vadd.f32 %v679, %v693
  %v722 = vadd.f32 %v682, %v693
  %v723 = vadd.f32 %v685, %v693
  %v724 = vadd.f32 %v688, %v693
  %v725 = vadd.f32 %v691, %v693
  %vm726 = vcmask 7168
  %727 = vst.msk [vmem:[%s7] sm:$0xff] %vm726, %v694
  %728 = vst.msk [vmem:[%s7 + $0x8] sm:$0xff] %vm726, %v695
  %729 = vst.msk [vmem:[%s7 + $0x10] sm:$0xff] %vm726, %v696
  %730 = vst.msk [vmem:[%s7 + $0x18] sm:$0xff] %vm726, %v697
  %731 = vst.msk [vmem:[%s7 + $0x20] sm:$0xff] %vm726, %v698
  %732 = vst.msk [vmem:[%s7 + $0x28] sm:$0xff] %vm726, %v699
  %733 = vst.msk [vmem:[%s7 + $0x30] sm:$0xff] %vm726, %v700
  %734 = vst.msk [vmem:[%s7 + $0x38] sm:$0xff] %vm726, %v701
  %735 = vst.msk [vmem:[%s7 + $0x40] sm:$0xff] %vm726, %v702
  %736 = vst.msk [vmem:[%s7 + $0x48] sm:$0xff] %vm726, %v703
  %737 = vst.msk [vmem:[%s7 + $0x50] sm:$0xff] %vm726, %v704
  %738 = vst.msk [vmem:[%s7 + $0x58] sm:$0xff] %vm726, %v705
  %739 = vst.msk [vmem:[%s7 + $0x60] sm:$0xff] %vm726, %v706
  %740 = vst.msk [vmem:[%s7 + $0x68] sm:$0xff] %vm726, %v707
  %741 = vst.msk [vmem:[%s7 + $0x70] sm:$0xff] %vm726, %v708
  %742 = vst.msk [vmem:[%s7 + $0x78] sm:$0xff] %vm726, %v709
  %743 = vst.msk [vmem:[%s7 + $0x80] sm:$0xff] %vm726, %v710
  %744 = vst.msk [vmem:[%s7 + $0x88] sm:$0xff] %vm726, %v711
  %745 = vst.msk [vmem:[%s7 + $0x90] sm:$0xff] %vm726, %v712
  %746 = vst.msk [vmem:[%s7 + $0x98] sm:$0xff] %vm726, %v713
  %747 = vst.msk [vmem:[%s7 + $0xa0] sm:$0xff] %vm726, %v714
  %748 = vst.msk [vmem:[%s7 + $0xa8] sm:$0xff] %vm726, %v715
  %749 = vst.msk [vmem:[%s7 + $0xb0] sm:$0xff] %vm726, %v716
  %750 = vst.msk [vmem:[%s7 + $0xb8] sm:$0xff] %vm726, %v717
  %751 = vst.msk [vmem:[%s7 + $0xc0] sm:$0xff] %vm726, %v718
  %752 = vst.msk [vmem:[%s7 + $0xc8] sm:$0xff] %vm726, %v719
  %753 = vst.msk [vmem:[%s7 + $0xd0] sm:$0xff] %vm726, %v720
  %754 = vst.msk [vmem:[%s7 + $0xd8] sm:$0xff] %vm726, %v721
  %755 = vst.msk [vmem:[%s7 + $0xe0] sm:$0xff] %vm726, %v722
  %756 = vst.msk [vmem:[%s7 + $0xe8] sm:$0xff] %vm726, %v723
  %757 = vst.msk [vmem:[%s7 + $0xf0] sm:$0xff] %vm726, %v724
  %758 = vst.msk [vmem:[%s7 + $0xf8] sm:$0xff] %vm726, %v725
  // Predicated region
  $region30: #{tpu_custom_call.1} parent=0 // pred_check
    _
  $region31: #{tpu_custom_call.1} parent=0 // pred_check_branch
    %760 = sbr.rel (0) target = $region33
  $region32: #{tpu_custom_call.1} parent=0 // pred_region
    _
  $region33: #{tpu_custom_call.1} parent=0 // pred_fallthru
    _
  // Predicated region
  $region34: #{tpu_custom_call.1} parent=0 // pred_check
    _
  $region35: #{tpu_custom_call.1} parent=0 // pred_check_branch
    %762 = sbr.rel (0) target = $region37
  $region36: #{tpu_custom_call.1} parent=0 // pred_region
    _
  $region37: #{tpu_custom_call.1} parent=0 // pred_fallthru
    _

</llo_original>
